<compile_context>
chip_gen: v7x
topology: tpu7x:2x2x1
jax: 0.10.0
libtpu: 0.0.40
codegen_flags: <defaults>
</compile_context>

<pallas_src>
import functools
import math

import jax
import jax.numpy as jnp
from jax.experimental import pallas as pl
from jax.experimental.pallas import tpu as pltpu


def _deoverlap_kernel(x_ref, w_ref, b_ref, o_ref):
    """One row tile: (r_tile, ncoefs) @ (ncoefs, N) + (1, N) -> (r_tile, N)."""
    y = jnp.dot(x_ref[...], w_ref[...], preferred_element_type=jnp.float32)
    o_ref[...] = (y + b_ref[...]).astype(o_ref.dtype)


_VMEM_BUDGET_BYTES = 8 * 1024 * 1024  # conservative; fits scoped VMEM defaults
                                      # on v5e (16 MiB), v6e (32 MiB), v7x (32 MiB)


def _row_tile(R, ncoefs, n_out):
    """Row-tile size: as large as the VMEM budget allows, a multiple of 8
    (sublane) unless it covers the whole row axis."""
    per_row_bytes = (ncoefs + n_out) * 4 * 2  # f32, double-buffered in + out tiles
    tile = (_VMEM_BUDGET_BYTES // per_row_bytes) // 8 * 8
    tile = max(8, min(tile, 4096))
    return R if R <= tile else tile


@functools.partial(jax.jit, static_argnums=(3,))
def deoverlap_block(x, w, b, nb_slices):
    """x: (B, C, F, ncoefs); w: (nwin, nwin) torch-Linear weight (out, in);
    b: (nwin,). Returns (B, C, F, nb_slices, nwin) matching the PyTorch loop."""
    B, C, F, ncoefs = x.shape
    nwin = w.shape[0]
    hop = nwin // 2
    needed = (nb_slices - 1) * hop + nwin
    if ncoefs < needed:
        raise ValueError(
            f"ncoefs={ncoefs} too small for nb_slices={nb_slices}, nwin={nwin}")

    R = B * C * F
    N = nb_slices * nwin

    # Banded weight: W_big[j*hop + k, j*nwin + m] = w[m, k]
    # (torch Linear: y_m = sum_k w[m, k] * x[j*hop + k]).
    w_t = w.T.astype(jnp.float32)                      # (in=k, out=m)
    w_big = jnp.zeros((ncoefs, N), jnp.float32)
    for j in range(nb_slices):
        w_big = w_big.at[j * hop:j * hop + nwin, j * nwin:(j + 1) * nwin].set(w_t)
    b_big = jnp.tile(b.astype(jnp.float32), nb_slices).reshape(1, N)

    x_flat = x.reshape(R, ncoefs)                      # no transpose: rows on sublanes
    r_tile = _row_tile(R, ncoefs, N)

    out = pl.pallas_call(
        _deoverlap_kernel,
        out_shape=jax.ShapeDtypeStruct((R, N), x.dtype),
        grid_spec=pltpu.PrefetchScalarGridSpec(
            num_scalar_prefetch=0,
            grid=(pl.cdiv(R, r_tile),),
            in_specs=[
                pl.BlockSpec((r_tile, ncoefs), lambda i: (i, 0)),   # row tile of x
                pl.BlockSpec((ncoefs, N), lambda i: (0, 0)),        # resident banded W
                pl.BlockSpec((1, N), lambda i: (0, 0)),             # resident bias row
            ],
            out_specs=pl.BlockSpec((r_tile, N), lambda i: (i, 0)),  # lane-dense output
        ),
        compiler_params=pltpu.CompilerParams(
            dimension_semantics=("parallel",)),  # row tiles shard across TCs on v7x
    )(x_flat, w_big, b_big)

    # (R, nb_slices*nwin) -> (B, C, F, nb_slices, nwin); pure reshape, no transpose.
    return out.reshape(B, C, F, nb_slices, nwin)


class DeOverlapNet:
    """JAX/Pallas port of the PyTorch DeOverlapNet (deterministic init).

    One Linear(nwin -> nwin, bias=True) per ragged slicq block, where
    nwin = nb_m_bins = slicq_sample_input[i].shape[-1] (mirrors the PyTorch
    constructor, whose sample blocks have the window size as their last dim).
    """
    # TODO(synk): the original __init__ also calls nsgt.overlap_add on the
    # sample input, but its result is unused there, so it is omitted here.

    def __init__(self, slicq_sample_input, key):
        self.deoverlap_wins = []
        self.weights = []
        self.biases = []
        for slicq_ in slicq_sample_input:
            nwin = slicq_.shape[-1]
            key, kw, kb = jax.random.split(key, 3)
            bound = 1.0 / math.sqrt(nwin)            # torch.nn.Linear default init
            w = jax.random.uniform(kw, (nwin, nwin), jnp.float32, -bound, bound)
            b = jax.random.uniform(kb, (nwin,), jnp.float32, -bound, bound)
            self.deoverlap_wins.append(nwin)
            self.weights.append(w)
            self.biases.append(b)

    def __call__(self, x, nb_slices, ragged_shapes=None):
        return self.deoverlap_add(x, nb_slices)

    def deoverlap_add(self, slicq, nb_slices):
        # One pallas_call per ragged block (blocks have distinct nwin/ncoefs).
        return [deoverlap_block(x, w, b, nb_slices)
                for x, w, b in zip(slicq, self.weights, self.biases)]


def ref_deoverlap(slicq, weights, biases, nb_slices):
    """Pure-JAX reference mirroring the PyTorch loop."""
    ret = []
    for x, w, b in zip(slicq, weights, biases):
        nwin = w.shape[0]
        hop = nwin // 2
        outs = []
        for j in range(nb_slices):
            seg = x[..., j * hop: j * hop + nwin]
            outs.append(jnp.einsum('bcfk,mk->bcfm', seg, w,
                                   precision=jax.lax.Precision.HIGHEST) + b)
        ret.append(jnp.stack(outs, axis=3))
    return ret


if __name__ == "__main__":
    key = jax.random.PRNGKey(0)
    nb_samples, nb_channels = 2, 2
    nb_slices = 8
    # ragged slicq blocks: (nb_f_bins, nb_m_bins == nwin)
    block_cfg = [(3, 16), (5, 32), (2, 64)]

    # Constructor sample input mirrors PyTorch: last dim == nb_m_bins (nwin).
    # Forward input is the overlap-added form: (B, C, F, ncoefs) with
    # ncoefs = (nb_slices + 1) * hop  >=  (nb_slices - 1) * hop + nwin.
    sample_blocks = []
    fwd_blocks = []
    kx = key
    for (F_bins, nwin) in block_cfg:
        hop = nwin // 2
        ncoefs = (nb_slices + 1) * hop
        kx, ks, kf = jax.random.split(kx, 3)
        sample_blocks.append(jax.random.normal(
            ks, (nb_samples, nb_channels, F_bins, nb_slices, nwin), jnp.float32))
        fwd_blocks.append(jax.random.normal(
            kf, (nb_samples, nb_channels, F_bins, ncoefs), jnp.float32))

    net = DeOverlapNet(sample_blocks, jax.random.PRNGKey(42))

    out = net(fwd_blocks, nb_slices)
    out = jax.block_until_ready(out)

    ref = ref_deoverlap(fwd_blocks, net.weights, net.biases, nb_slices)
    for o, r in zip(out, ref):
        assert o.shape == r.shape, (o.shape, r.shape)
        assert o.dtype == r.dtype, (o.dtype, r.dtype)
        err = float(jnp.max(jnp.abs(o - r)))
        assert jnp.allclose(o, r, atol=1e-3, rtol=1e-3), err

    print("KERNEL_OK")
</pallas_src>

<mosaic_0001>
module attributes {stable_mosaic.version = 11 : i64} {
  func.func @_deoverlap_kernel(%arg0: i32, %arg1: memref<12x72xf32, #tpu.memory_space<vmem>>, %arg2: memref<72x128xf32, #tpu.memory_space<vmem>>, %arg3: memref<1x128xf32, #tpu.memory_space<vmem>>, %arg4: memref<12x128xf32, #tpu.memory_space<vmem>>) attributes {dimension_semantics = [#tpu.dimension_semantics<parallel>], iteration_bounds = array<i64: 1>, scalar_prefetch = 0 : i64, scratch_operands = 0 : i64, tpu.core_type = #tpu.core_type<tc>, window_params = [{transform_indices = @transform_0, window_bounds = array<i64: 12, 72>}, {pipeline_mode = #tpu.pipeline_mode<synchronous>, transform_indices = @transform_1, window_bounds = array<i64: 72, 128>}, {pipeline_mode = #tpu.pipeline_mode<synchronous>, transform_indices = @transform_2, window_bounds = array<i64: 1, 128>}, {transform_indices = @transform_3, window_bounds = array<i64: 12, 128>}]} {
    %c0 = arith.constant 0 : index
    %c0_0 = arith.constant 0 : index
    %0 = vector.load %arg1[%c0, %c0_0] : memref<12x72xf32, #tpu.memory_space<vmem>>, vector<12x72xf32>
    %c0_1 = arith.constant 0 : index
    %c0_2 = arith.constant 0 : index
    %1 = vector.load %arg2[%c0_1, %c0_2] : memref<72x128xf32, #tpu.memory_space<vmem>>, vector<72x128xf32>
    %cst = arith.constant dense<0.000000e+00> : vector<12x128xf32>
    %2 = tpu.matmul %0, %1, %cst {dimension_numbers = #tpu.dot_dimension_numbers<[1], [0], [0], [1], [0, 0, 1, 1], [], []>} : vector<12x72xf32>, vector<72x128xf32>, vector<12x128xf32> -> vector<12x128xf32>
    %c0_3 = arith.constant 0 : index
    %c0_4 = arith.constant 0 : index
    %3 = vector.load %arg3[%c0_3, %c0_4] : memref<1x128xf32, #tpu.memory_space<vmem>>, vector<1x128xf32>
    %4 = vector.broadcast %3 : vector<1x128xf32> to vector<12x128xf32>
    %5 = arith.addf %2, %4 : vector<12x128xf32>
    %c0_5 = arith.constant 0 : index
    %c0_6 = arith.constant 0 : index
    %6 = vector.load %arg4[%c0_5, %c0_6] : memref<12x128xf32, #tpu.memory_space<vmem>>, vector<12x128xf32>
    tpu.vector_store %arg4[%c0_5, %c0_6], %5 {strides = array<i32>} : memref<12x128xf32, #tpu.memory_space<vmem>>, vector<12x128xf32>,
    return
  }
  func.func @transform_0(%arg0: i32) -> (i32, i32) {
    %c0_i32 = arith.constant 0 : i32
    %c0_i32_0 = arith.constant 0 : i32
    return %arg0, %c0_i32 : i32, i32
  }
  func.func @transform_1(%arg0: i32) -> (i32, i32) {
    %c0_i32 = arith.constant 0 : i32
    %c0_i32_0 = arith.constant 0 : i32
    %c0_i32_1 = arith.constant 0 : i32
    return %c0_i32, %c0_i32_0 : i32, i32
  }
  func.func @transform_2(%arg0: i32) -> (i32, i32) {
    %c0_i32 = arith.constant 0 : i32
    %c0_i32_0 = arith.constant 0 : i32
    %c0_i32_1 = arith.constant 0 : i32
    return %c0_i32, %c0_i32_0 : i32, i32
  }
  func.func @transform_3(%arg0: i32) -> (i32, i32) {
    %c0_i32 = arith.constant 0 : i32
    %c0_i32_0 = arith.constant 0 : i32
    return %arg0, %c0_i32 : i32, i32
  }
}

</mosaic_0001>

<llo_original>
// kernel: tile.8
$region0: #{tile.8}
  #allocation0 [shape = 's32[1]{0}', space=sflag, size = 0x4, scoped, tag = 'scoped memory for tile.8']
  %s0 = inlined_call_operand.vmem [shape: f32[16], index: 0, kind: input, shape index: {}]
  %s1 = inlined_call_operand.vmem [shape: f32[8,16], index: 1, kind: output, shape index: {}]
  // Predicated region
  $region2: #{tile.8} parent=0 // pred_check
    _
  $region3: #{tile.8} parent=0 // pred_check_branch
    %3 = sbr.rel (0) target = $region5
  $region4: #{tile.8} parent=0 // pred_region
    _
  $region5: #{tile.8} parent=0 // pred_fallthru
    _
  %v4 = vld [vmem:[%s0] ss:$0 sm:$0xff]
  %5 = vst [vmem:[%s1] sm:$0xff] %v4

// kernel: tile.9
$region0: #{tile.9}
  %s0 = inlined_call_operand.vmem [shape: f32[8,16], index: 0, kind: input, shape index: {}]
  %s1 = inlined_call_operand.vmem [shape: f32[1,128], index: 1, kind: output, shape index: {}]
  $region1: #{tile.9} parent=0
    #allocation0 [shape = 'u8[4096]{0}', space=vmem, size = 0x1000, scoped, tag = 'scoped mem for output reshape']
    %v2 = vld [vmem:[%s0] sm:$0x1]
    %vm3 = vcmask 130048
    %4 = vst.msk [vmem:[#allocation0] sm:$0x1] %vm3, %v2
    %s5 = scalar_lea.vmem %s0, 7
    %v6 = vld [vmem:[%s5] sm:$0x1]
    %7 = vrot.lane.b32.xlu0 %v6, 112
    %v8 = vpop.permute.xlu0 %7
    %vm9 = vcmask 1048448
    %10 = vst.msk [vmem:[#allocation0] sm:$0x1] %vm9, %v8
    %s11 = scalar_lea.vmem %s0, 6
    %v12 = vld [vmem:[%s11] sm:$0x1]
    %13 = vrot.lane.b32.xlu0 %v12, 96
    %v14 = vpop.permute.xlu0 %13
    %vm15 = vcmask 917248
    %16 = vst.msk [vmem:[#allocation0] sm:$0x1] %vm15, %v14
    %s17 = scalar_lea.vmem %s0, 5
    %v18 = vld [vmem:[%s17] sm:$0x1]
    %19 = vrot.lane.b32.xlu0 %v18, 80
    %v20 = vpop.permute.xlu0 %19
    %vm21 = vcmask 786048
    %22 = vst.msk [vmem:[#allocation0] sm:$0x1] %vm21, %v20
    %s23 = scalar_lea.vmem %s0, 4
    %v24 = vld [vmem:[%s23] sm:$0x1]
    %25 = vrot.lane.b32.xlu0 %v24, 64
    %v26 = vpop.permute.xlu0 %25
    %vm27 = vcmask 654848
    %28 = vst.msk [vmem:[#allocation0] sm:$0x1] %vm27, %v26
    %s29 = scalar_lea.vmem %s0, 3
    %v30 = vld [vmem:[%s29] sm:$0x1]
    %31 = vrot.lane.b32.xlu0 %v30, 48
    %v32 = vpop.permute.xlu0 %31
    %vm33 = vcmask 523648
    %34 = vst.msk [vmem:[#allocation0] sm:$0x1] %vm33, %v32
    %s35 = scalar_lea.vmem %s0, 2
    %v36 = vld [vmem:[%s35] sm:$0x1]
    %37 = vrot.lane.b32.xlu0 %v36, 32
    %v38 = vpop.permute.xlu0 %37
    %vm39 = vcmask 392448
    %40 = vst.msk [vmem:[#allocation0] sm:$0x1] %vm39, %v38
    %s41 = scalar_lea.vmem %s0, 1
    %v42 = vld [vmem:[%s41] sm:$0x1]
    %43 = vrot.lane.b32.xlu0 %v42, 16
    %v44 = vpop.permute.xlu0 %43
    %vm45 = vcmask 261248
    %46 = vst.msk [vmem:[#allocation0] sm:$0x1] %vm45, %v44
    %s48 = sshllo.u32 0, 1
    %v50 = vld [vmem:[#allocation0] sm:%s48]
    %s51 = sshllo.u32 0, 1
    %52 = vst [vmem:[%s1] sm:%s51] %v50

// kernel: deoverlap_block.1
$region0: #{deoverlap_block.1}
  #allocation0 [shape = 'u32[]', space=smem, size = 0x4, offset = 0x4, fixed_abs, tag = 'smem constant byte address 0x4 - core index']
  #allocation1 [shape = 'u32[144,128]{1,0:T(1,128)}', space=vmem, size = 0x12000, scoped, tag = 'internal scratch']
  %s0 = inlined_call_operand.vmem [shape: f32[12,72], index: 0, kind: input, shape index: {}]
  %s1 = inlined_call_operand.vmem [shape: f32[72,128], index: 1, kind: input, shape index: {}]
  %s2 = inlined_call_operand.vmem [shape: f32[1,128], index: 2, kind: input, shape index: {}]
  %s3 = inlined_call_operand.vmem [shape: f32[12,128], index: 3, kind: output, shape index: {}]
  %s4 = sld [smem:[#allocation0]]
  $region22: #{deoverlap_block.1} parent=0
    _
  %s6 = ssub.s32 1, %s4
  %s7 = scalar_select 0, %s6, %s4
  // Predicated region
  $region2: #{deoverlap_block.1} parent=0 // pred_check
    _
  $region3: #{deoverlap_block.1} parent=0 // pred_check_branch
    %9 = sbr.rel (0) target = $region5
  $region4: #{deoverlap_block.1} parent=0 // pred_region
    _
  $region5: #{deoverlap_block.1} parent=0 // pred_fallthru
    _
  // Predicated region
  $region6: #{deoverlap_block.1} parent=0 // pred_check
    _
  $region7: #{deoverlap_block.1} parent=0 // pred_check_branch
    %11 = sbr.rel (0) target = $region9
  $region8: #{deoverlap_block.1} parent=0 // pred_region
    _
  $region9: #{deoverlap_block.1} parent=0 // pred_fallthru
    _
  // Predicated region
  $region10: #{deoverlap_block.1} parent=0 // pred_check
    _
  $region11: #{deoverlap_block.1} parent=0 // pred_check_branch
    %13 = sbr.rel (0) target = $region13
  $region12: #{deoverlap_block.1} parent=0 // pred_region
    _
  $region13: #{deoverlap_block.1} parent=0 // pred_fallthru
    _
  %v14 = vld [vmem:[%s0] sm:$0xff]
  %v15 = vld [vmem:[%s0 + $0x8] sm:$0xf]
  %v16 = vld [vmem:[%s1] sm:$0xff]
  %v17 = vld [vmem:[%s1 + $0x8] sm:$0xff]
  %v18 = vld [vmem:[%s1 + $0x10] sm:$0xff]
  %v19 = vld [vmem:[%s1 + $0x18] sm:$0xff]
  %v20 = vld [vmem:[%s1 + $0x20] sm:$0xff]
  %v21 = vld [vmem:[%s1 + $0x28] sm:$0xff]
  %v22 = vld [vmem:[%s1 + $0x30] sm:$0xff]
  %v23 = vld [vmem:[%s1 + $0x38] sm:$0xff]
  %v24 = vld [vmem:[%s1 + $0x40] sm:$0xff]
  %v25 = vld [vmem:[%s2] sm:$0x1]
  %v27 = vlaneseq
  %v28 = vshrl.u32 %v27, 7
  %v29 = vsub.s32 0, %v28
  %v30 = vrot.slane %v25, %v29
  %vm32 = vcmask 588800
  %v34 = vsel %vm32, %v14, 0
  %v37 = vsel %vm32, %v15, 0
  %39 = vmatprep.subr.mxu0 0.0
  %40 = vmatpush1.msra.mxu0 %v16
  %41 = vmatprep.subr.mxu0 0.0
  %42 = vmatpush1.msra.mxu0 %v17
  %43 = vmatprep.subr.mxu0 0.0
  %44 = vmatpush1.msra.mxu0 %v18
  %45 = vmatprep.subr.mxu0 0.0
  %46 = vmatpush1.msra.mxu0 %v19
  %47 = vmatprep.subr.mxu0 0.0
  %48 = vmatpush1.msra.mxu0 %v20
  %49 = vmatprep.subr.mxu0 0.0
  %50 = vmatpush1.msra.mxu0 %v21
  %51 = vmatprep.subr.mxu0 0.0
  %52 = vmatpush1.msra.mxu0 %v22
  %53 = vmatprep.subr.mxu0 0.0
  %54 = vmatpush1.msra.mxu0 %v23
  %55 = vmatprep.subr.mxu0 0.0
  %56 = vmatpush1.msra.mxu0 %v24
  %57 = vmatprep.subr.mxu0 0.0
  %58 = vmatpush1.msra.mxu0 0.0
  %59 = vmatprep.subr.mxu0 0.0
  %60 = vmatpush1.msra.mxu0 0.0
  %61 = vmatprep.subr.mxu0 0.0
  %62 = vmatpush1.msra.mxu0 0.0
  %63 = vmatprep.subr.mxu0 0.0
  %64 = vmatpush1.msra.mxu0 0.0
  %65 = vmatprep.subr.mxu0 0.0
  %66 = vmatpush1.msra.mxu0 0.0
  %67 = vmatprep.subr.mxu0 0.0
  %68 = vmatpush1.msra.mxu0 0.0
  %69 = vmatprep.subr.mxu0 0.0
  %70 = vmatpush1.msra.mxu0 0.0
  %71 = vmatprep.subr.mxu0 0.0
  %72 = vmatpush1.msra.mxu0 0.0
  %73 = vmatprep.subr.mxu0 0.0
  %74 = vmatpush1.msra.mxu0 0.0
  %75 = vmatprep.subr.mxu0 0.0
  %76 = vmatpush1.msra.mxu0 0.0
  %77 = vmatprep.subr.mxu0 0.0
  %78 = vmatpush1.msra.mxu0 0.0
  %79 = vmatprep.subr.mxu0 0.0
  %80 = vmatpush1.msra.mxu0 0.0
  %81 = vmatprep.subr.mxu0 0.0
  %82 = vmatpush1.msra.mxu0 0.0
  %83 = vmatprep.subr.mxu0 0.0
  %84 = vmatpush1.msra.mxu0 0.0
  %85 = vmatprep.subr.mxu0 0.0
  %86 = vmatpush1.msra.mxu0 0.0
  %87 = vmatprep.subr.mxu0 0.0
  %88 = vmatpush1.msra.mxu0 0.0
  %89 = vmatprep.subr.mxu0 0.0
  %90 = vmatpush1.msra.mxu0 0.0
  %91 = vmatprep.subr.mxu0 0.0
  %92 = vmatpush1.msra.mxu0 0.0
  %93 = vmatprep.subr.mxu0 0.0
  %94 = vmatpush1.msra.mxu0 0.0
  %95 = vmatprep.subr.mxu0 0.0
  %96 = vmatpush1.msra.mxu0 0.0
  %97 = vmatprep.subr.mxu0 0.0
  %98 = vmatpush1.msra.mxu0 0.0
  %99 = vmatprep.subr.mxu0 0.0
  %100 = vmatpush1.msra.mxu0 0.0
  %101 = vmatprep.subr.mxu0 0.0
  %102 = vmatpush1.msra.mxu0 0.0
  %103 = vmatprep.mubr.f32.mxu0 0.0
  %104 = vmatmul.mubr.f32.gmra.mrb[0].mxu0 %v34
  %v105 = vpop.f32.mrb[0].mxu0
  %v106 = vadd.f32 %v30, %v105
  %v107 = vpop.f32.mrb[0].mxu0
  %108 = vmatprep.mubr.f32.mxu0 0.0
  %109 = vmatmul.mubr.f32.gmra.mrb[0].mxu0 %v37
  %v110 = vpop.f32.mrb[0].mxu0
  %v111 = vadd.f32 %v30, %v110
  %v112 = vpop.f32.mrb[0].mxu0
  %113 = vdwg.mxu0
  %114 = vst [vmem:[%s3] sm:$0xff] %v106
  %115 = vst [vmem:[%s3 + $0x8] sm:$0xf] %v111
  // Predicated region
  $region14: #{deoverlap_block.1} parent=0 // pred_check
    _
  $region15: #{deoverlap_block.1} parent=0 // pred_check_branch
    %117 = sbr.rel (0) target = $region17
  $region16: #{deoverlap_block.1} parent=0 // pred_region
    _
  $region17: #{deoverlap_block.1} parent=0 // pred_fallthru
    _
  // Predicated region
  $region18: #{deoverlap_block.1} parent=0 // pred_check
    _
  $region19: #{deoverlap_block.1} parent=0 // pred_check_branch
    %119 = sbr.rel (0) target = $region21
  $region20: #{deoverlap_block.1} parent=0 // pred_region
    _
  $region21: #{deoverlap_block.1} parent=0 // pred_fallthru
    _

</llo_original>
